<compile_context>
chip_gen: v7x
topology: tpu7x:2x2x1
jax: 0.10.0
libtpu: 0.0.40
codegen_flags: <defaults>
</compile_context>

<pallas_src>
import jax
import jax.numpy as jnp
from jax.experimental import pallas as pl
from jax.experimental.pallas import tpu as pltpu

_LANES = 128
_SUBLANES = 8


# ---------------------------------------------------------------------------
# Kernel
# ---------------------------------------------------------------------------
def _mix_loss_kernel(x_ref, y_ref, sse_out, sae_out, sse_acc, sae_acc):
    """Fused streaming reduction for MSE + L1.

    x_ref, y_ref : (tm, 128) VMEM tiles in the input's native dtype
    sse_out      : (1, 8, 128) f32  per-core partial sum of (x-y)^2
    sae_out      : (1, 8, 128) f32  per-core partial sum of |x-y|
    sse_acc/sae_acc : (8, 128) f32 VMEM vector accumulators (scratch)
    """
    i = pl.program_id(1)  # inner (reduction) axis

    @pl.when(i == 0)
    def _init():
        sse_acc[...] = jnp.zeros_like(sse_acc)
        sae_acc[...] = jnp.zeros_like(sae_acc)

    d = x_ref[...].astype(jnp.float32) - y_ref[...].astype(jnp.float32)
    # Keep per-(sublane, lane) partials: the steady-state loop is pure VPU
    # adds (no cross-lane XLU reduce, no SMEM scalar RMW chain).
    sse_acc[...] += jnp.sum((d * d).reshape(-1, _SUBLANES, _LANES), axis=0)
    sae_acc[...] += jnp.sum(jnp.abs(d).reshape(-1, _SUBLANES, _LANES), axis=0)

    @pl.when(i == pl.num_programs(1) - 1)
    def _finalize():
        sse_out[0] = sse_acc[...]
        sae_out[0] = sae_acc[...]


# ---------------------------------------------------------------------------
# Wrapper (the MixOfLosses "forward")
# ---------------------------------------------------------------------------
def _round_up(a, b):
    return -(-a // b) * b


def mix_of_losses(x, y, weights=(0.7, 0.3), *, tm_max=2048):
    """Equivalent of MixOfLosses([MSELoss(), L1Loss()], weights).forward(x, y).

    Returns {"MSELoss": scalar, "L1Loss": scalar}.
    """
    assert x.shape == y.shape, "x and y must have the same shape"
    assert x.dtype == y.dtype, "x and y must have the same dtype"

    n = int(x.size)
    itemsize = jnp.dtype(x.dtype).itemsize
    # Packed-sublane multiple: 8 for f32, 16 for bf16, 32 for int8/fp8.
    sub = max(_SUBLANES, 32 // itemsize)

    rows = -(-n // _LANES)
    tm = min(_round_up(tm_max, sub), max(sub, _round_up(rows, sub)))
    total_blocks = -(-rows // tm)
    n_split = 2 if total_blocks >= 2 else 1          # megacore sharding (v7x)
    blocks_per_split = -(-total_blocks // n_split)
    rows_padded = n_split * blocks_per_split * tm
    pad = rows_padded * _LANES - n

    x_flat = x.reshape(-1)
    y_flat = y.reshape(-1)
    if pad:
        # Zero-pad BOTH operands -> pad region contributes 0 to both sums.
        x_flat = jnp.pad(x_flat, (0, pad))
        y_flat = jnp.pad(y_flat, (0, pad))
    x2d = x_flat.reshape(rows_padded, _LANES)
    y2d = y_flat.reshape(rows_padded, _LANES)

    in_map = lambda c, i: (c * blocks_per_split + i, 0)
    out_map = lambda c, i: (c, 0, 0)

    sse_part, sae_part = pl.pallas_call(
        _mix_loss_kernel,
        out_shape=(
            jax.ShapeDtypeStruct((n_split, _SUBLANES, _LANES), jnp.float32),
            jax.ShapeDtypeStruct((n_split, _SUBLANES, _LANES), jnp.float32),
        ),
        grid_spec=pltpu.PrefetchScalarGridSpec(
            num_scalar_prefetch=0,
            grid=(n_split, blocks_per_split),
            in_specs=[
                pl.BlockSpec((tm, _LANES), in_map),
                pl.BlockSpec((tm, _LANES), in_map),
            ],
            out_specs=[
                pl.BlockSpec((1, _SUBLANES, _LANES), out_map),
                pl.BlockSpec((1, _SUBLANES, _LANES), out_map),
            ],
            scratch_shapes=[
                pltpu.VMEM((_SUBLANES, _LANES), jnp.float32),
                pltpu.VMEM((_SUBLANES, _LANES), jnp.float32),
            ],
        ),
        compiler_params=pltpu.CompilerParams(
            dimension_semantics=("parallel", "arbitrary"),
        ),
    )(x2d, y2d)

    inv_n = 1.0 / float(n)
    # Single cheap cross-lane reduce + per-loss weighting on tiny partials.
    return {
        "MSELoss": jnp.sum(sse_part) * (inv_n * float(weights[0])),
        "L1Loss": jnp.sum(sae_part) * (inv_n * float(weights[1])),
    }


# ---------------------------------------------------------------------------
# Reference (pure JAX) for a sanity check
# ---------------------------------------------------------------------------
def mix_of_losses_ref(x, y, weights=(0.7, 0.3)):
    d = x.astype(jnp.float32) - y.astype(jnp.float32)
    return {
        "MSELoss": jnp.mean(d * d) * weights[0],
        "L1Loss": jnp.mean(jnp.abs(d)) * weights[1],
    }


def _check(x, y, rtol, atol):
    out = jax.block_until_ready(mix_of_losses(x, y))
    ref = mix_of_losses_ref(x, y)
    for k in out:
        assert jnp.allclose(out[k], ref[k], rtol=rtol, atol=atol), (
            k, out[k], ref[k])


if __name__ == "__main__":
    key = jax.random.PRNGKey(0)
    kx, ky = jax.random.split(key)

    # Primary small NCHW case consistent with a conv-style pipeline (f32).
    x = jax.random.normal(kx, (2, 4, 16, 16), dtype=jnp.float32)
    y = jax.random.normal(ky, (2, 4, 16, 16), dtype=jnp.float32)
    _check(x, y, rtol=1e-5, atol=1e-6)

    # Non-divisible shape -> exercises the zero-padded remainder path.
    xp = jax.random.normal(kx, (3, 5, 17, 13), dtype=jnp.float32)
    yp = jax.random.normal(ky, (3, 5, 17, 13), dtype=jnp.float32)
    _check(xp, yp, rtol=1e-5, atol=1e-6)

    # bf16 inputs, multiple blocks -> exercises native-dtype streaming,
    # the 2-way parallel split, and multi-step accumulation.
    xb = jax.random.normal(kx, (8, 16, 128, 64), dtype=jnp.bfloat16)
    yb = jax.random.normal(ky, (8, 16, 128, 64), dtype=jnp.bfloat16)
    _check(xb, yb, rtol=2e-4, atol=1e-6)

    print("KERNEL_OK")
</pallas_src>

<mosaic_0001>
module attributes {stable_mosaic.version = 11 : i64} {
  func.func @_mix_loss_kernel(%arg0: i32, %arg1: i32, %arg2: memref<16x128xf32, #tpu.memory_space<vmem>>, %arg3: memref<16x128xf32, #tpu.memory_space<vmem>>, %arg4: memref<1x8x128xf32, #tpu.memory_space<vmem>>, %arg5: memref<1x8x128xf32, #tpu.memory_space<vmem>>, %arg6: memref<8x128xf32, #tpu.memory_space<vmem>>, %arg7: memref<8x128xf32, #tpu.memory_space<vmem>>) attributes {dimension_semantics = [#tpu.dimension_semantics<parallel>, #tpu.dimension_semantics<arbitrary>], iteration_bounds = array<i64: 1, 1>, scalar_prefetch = 0 : i64, scratch_operands = 2 : i64, tpu.core_type = #tpu.core_type<tc>, window_params = [{transform_indices = @transform_0, window_bounds = array<i64: 16, 128>}, {transform_indices = @transform_1, window_bounds = array<i64: 16, 128>}, {transform_indices = @transform_2, window_bounds = array<i64: 1, 8, 128>}, {transform_indices = @transform_3, window_bounds = array<i64: 1, 8, 128>}]} {
    %c0_i32 = arith.constant 0 : i32
    %0 = arith.cmpi eq, %arg1, %c0_i32 : i32
    %1 = arith.extui %0 : i1 to i32
    %c0_i32_0 = arith.constant 0 : i32
    %2 = arith.cmpi ne, %1, %c0_i32_0 : i32
    scf.if %2 {
      %cst_15 = arith.constant 0.000000e+00 : f32
      %21 = vector.broadcast %cst_15 : f32 to vector<8x128xf32>
      %c0_16 = arith.constant 0 : index
      %c0_17 = arith.constant 0 : index
      %22 = vector.load %arg6[%c0_16, %c0_17] : memref<8x128xf32, #tpu.memory_space<vmem>>, vector<8x128xf32>
      tpu.vector_store %arg6[%c0_16, %c0_17], %21 {strides = array<i32>} : memref<8x128xf32, #tpu.memory_space<vmem>>, vector<8x128xf32>,
      %cst_18 = arith.constant 0.000000e+00 : f32
      %23 = vector.broadcast %cst_18 : f32 to vector<8x128xf32>
      %c0_19 = arith.constant 0 : index
      %c0_20 = arith.constant 0 : index
      %24 = vector.load %arg7[%c0_19, %c0_20] : memref<8x128xf32, #tpu.memory_space<vmem>>, vector<8x128xf32>
      tpu.vector_store %arg7[%c0_19, %c0_20], %23 {strides = array<i32>} : memref<8x128xf32, #tpu.memory_space<vmem>>, vector<8x128xf32>,
    } else {
    }
    %c0 = arith.constant 0 : index
    %c0_1 = arith.constant 0 : index
    %3 = vector.load %arg2[%c0, %c0_1] : memref<16x128xf32, #tpu.memory_space<vmem>>, vector<16x128xf32>
    %c0_2 = arith.constant 0 : index
    %c0_3 = arith.constant 0 : index
    %4 = vector.load %arg3[%c0_2, %c0_3] : memref<16x128xf32, #tpu.memory_space<vmem>>, vector<16x128xf32>
    %5 = arith.subf %3, %4 : vector<16x128xf32>
    %c0_4 = arith.constant 0 : index
    %c0_5 = arith.constant 0 : index
    %6 = vector.load %arg6[%c0_4, %c0_5] : memref<8x128xf32, #tpu.memory_space<vmem>>, vector<8x128xf32>
    %7 = arith.mulf %5, %5 : vector<16x128xf32>
    %8 = vector.shape_cast %7 : vector<16x128xf32> to vector<2x8x128xf32>
    %cst = arith.constant dense<0.000000e+00> : vector<8x128xf32>
    %9 = vector.multi_reduction <add>, %8, %cst [0] : vector<2x8x128xf32> to vector<8x128xf32>
    %10 = arith.addf %6, %9 : vector<8x128xf32>
    %c0_6 = arith.constant 0 : index
    %c0_7 = arith.constant 0 : index
    %11 = vector.load %arg6[%c0_6, %c0_7] : memref<8x128xf32, #tpu.memory_space<vmem>>, vector<8x128xf32>
    tpu.vector_store %arg6[%c0_6, %c0_7], %10 {strides = array<i32>} : memref<8x128xf32, #tpu.memory_space<vmem>>, vector<8x128xf32>,
    %c0_8 = arith.constant 0 : index
    %c0_9 = arith.constant 0 : index
    %12 = vector.load %arg7[%c0_8, %c0_9] : memref<8x128xf32, #tpu.memory_space<vmem>>, vector<8x128xf32>
    %13 = math.absf %5 : vector<16x128xf32>
    %14 = vector.shape_cast %13 : vector<16x128xf32> to vector<2x8x128xf32>
    %cst_10 = arith.constant dense<0.000000e+00> : vector<8x128xf32>
    %15 = vector.multi_reduction <add>, %14, %cst_10 [0] : vector<2x8x128xf32> to vector<8x128xf32>
    %16 = arith.addf %12, %15 : vector<8x128xf32>
    %c0_11 = arith.constant 0 : index
    %c0_12 = arith.constant 0 : index
    %17 = vector.load %arg7[%c0_11, %c0_12] : memref<8x128xf32, #tpu.memory_space<vmem>>, vector<8x128xf32>
    tpu.vector_store %arg7[%c0_11, %c0_12], %16 {strides = array<i32>} : memref<8x128xf32, #tpu.memory_space<vmem>>, vector<8x128xf32>,
    %c0_i32_13 = arith.constant 0 : i32
    %18 = arith.cmpi eq, %arg1, %c0_i32_13 : i32
    %19 = arith.extui %18 : i1 to i32
    %c0_i32_14 = arith.constant 0 : i32
    %20 = arith.cmpi ne, %19, %c0_i32_14 : i32
    scf.if %20 {
      %c0_15 = arith.constant 0 : index
      %c0_16 = arith.constant 0 : index
      %21 = vector.load %arg6[%c0_15, %c0_16] : memref<8x128xf32, #tpu.memory_space<vmem>>, vector<8x128xf32>
      %c0_17 = arith.constant 0 : index
      %c0_18 = arith.constant 0 : index
      %c0_19 = arith.constant 0 : index
      %22 = vector.load %arg4[%c0_17, %c0_18, %c0_19] : memref<1x8x128xf32, #tpu.memory_space<vmem>>, vector<1x8x128xf32>
      %23 = vector.shape_cast %22 : vector<1x8x128xf32> to vector<8x128xf32>
      %24 = vector.shape_cast %21 : vector<8x128xf32> to vector<1x8x128xf32>
      tpu.vector_store %arg4[%c0_17, %c0_18, %c0_19], %24 {strides = array<i32>} : memref<1x8x128xf32, #tpu.memory_space<vmem>>, vector<1x8x128xf32>,
      %c0_20 = arith.constant 0 : index
      %c0_21 = arith.constant 0 : index
      %25 = vector.load %arg7[%c0_20, %c0_21] : memref<8x128xf32, #tpu.memory_space<vmem>>, vector<8x128xf32>
      %c0_22 = arith.constant 0 : index
      %c0_23 = arith.constant 0 : index
      %c0_24 = arith.constant 0 : index
      %26 = vector.load %arg5[%c0_22, %c0_23, %c0_24] : memref<1x8x128xf32, #tpu.memory_space<vmem>>, vector<1x8x128xf32>
      %27 = vector.shape_cast %26 : vector<1x8x128xf32> to vector<8x128xf32>
      %28 = vector.shape_cast %25 : vector<8x128xf32> to vector<1x8x128xf32>
      tpu.vector_store %arg5[%c0_22, %c0_23, %c0_24], %28 {strides = array<i32>} : memref<1x8x128xf32, #tpu.memory_space<vmem>>, vector<1x8x128xf32>,
    } else {
    }
    return
  }
  func.func @transform_0(%arg0: i32, %arg1: i32) -> (i32, i32) {
    %c1_i32 = arith.constant 1 : i32
    %0 = arith.muli %arg0, %c1_i32 : i32
    %1 = arith.addi %0, %arg1 : i32
    %c0_i32 = arith.constant 0 : i32
    %c0_i32_0 = arith.constant 0 : i32
    return %1, %c0_i32 : i32, i32
  }
  func.func @transform_1(%arg0: i32, %arg1: i32) -> (i32, i32) {
    %c1_i32 = arith.constant 1 : i32
    %0 = arith.muli %arg0, %c1_i32 : i32
    %1 = arith.addi %0, %arg1 : i32
    %c0_i32 = arith.constant 0 : i32
    %c0_i32_0 = arith.constant 0 : i32
    return %1, %c0_i32 : i32, i32
  }
  func.func @transform_2(%arg0: i32, %arg1: i32) -> (i32, i32, i32) {
    %c0_i32 = arith.constant 0 : i32
    %c0_i32_0 = arith.constant 0 : i32
    %c0_i32_1 = arith.constant 0 : i32
    return %arg0, %c0_i32, %c0_i32_0 : i32, i32, i32
  }
  func.func @transform_3(%arg0: i32, %arg1: i32) -> (i32, i32, i32) {
    %c0_i32 = arith.constant 0 : i32
    %c0_i32_0 = arith.constant 0 : i32
    %c0_i32_1 = arith.constant 0 : i32
    return %arg0, %c0_i32, %c0_i32_0 : i32, i32, i32
  }
}

</mosaic_0001>

<llo_original>
// kernel: tpu_custom_call.1
$region0: #{tpu_custom_call.1}
  #allocation0 [shape = 'u32[]', space=smem, size = 0x4, offset = 0x4, fixed_abs, tag = 'smem constant byte address 0x4 - core index']
  #allocation1 [shape = 'u32[144,128]{1,0:T(1,128)}', space=vmem, size = 0x12000, scoped, tag = 'internal scratch']
  #allocation2 [shape = 'f32[8,128]{1,0:T(8,128)}', space=vmem, size = 0x1000, scoped, tag = 'scratch operand']
  #allocation3 [shape = 'f32[8,128]{1,0:T(8,128)}', space=vmem, size = 0x1000, scoped, tag = 'scratch operand']
  %s0 = inlined_call_operand.hbm [shape: f32[16,128], index: 0, kind: input, shape index: {}]
  %s1 = inlined_call_operand.hbm [shape: f32[16,128], index: 1, kind: input, shape index: {}]
  %s2 = inlined_call_operand.hbm [shape: f32[1,8,128], index: 2, kind: output, shape index: {0}]
  %s3 = inlined_call_operand.hbm [shape: f32[1,8,128], index: 3, kind: output, shape index: {1}]
  %4 = xla_tuple %s2, %s3
  %s5 = sld [smem:[#allocation0]]
  $region42: #{tpu_custom_call.1} parent=0
    _
  %s7 = ssub.s32 1, %s5
  %s8 = scalar_select 0, %s7, %s5
  $region1: #{tpu_custom_call.1} parent=0
    #allocation4 [shape = 'u8[8192]{0}', space=vmem, size = 0x2000, scoped, tag = 'input window, operand 0, single buffered']
    #allocation5 [shape = 's32[1]{0}', space=sflag, size = 0x4, scoped, tag = 'scoped memory for tpu_custom_call.1']
    #allocation6 [shape = 's32[1]{0}', space=sflag, size = 0x4, scoped, tag = 'scoped memory for tpu_custom_call.1']
    #allocation7 [shape = 'u8[8192]{0}', space=vmem, size = 0x2000, scoped, tag = 'input window, operand 1, single buffered']
    #allocation8 [shape = 's32[1]{0}', space=sflag, size = 0x4, scoped, tag = 'scoped memory for tpu_custom_call.1']
    #allocation9 [shape = 'u8[4096]{0}', space=vmem, size = 0x1000, scoped, tag = 'output window, operand 0, single buffered']
    #allocation10 [shape = 'u8[4096]{0}', space=vmem, size = 0x1000, scoped, tag = 'output window, operand 1, single buffered']
    #allocation11 [shape = 's32[1]{0}', space=sflag, size = 0x4, scoped, tag = 'scoped memory for tpu_custom_call.1']
    %9 = vsyncpa [#allocation5], 0
    %10 = vsyncpa [#allocation8], 0
    %11 = vsyncpa [#allocation6], 0
    %12 = vsyncpa [#allocation11], 0
    // Predicated region
    $region2: #{tpu_custom_call.1} parent=1 // pred_check
      _
    $region3: #{tpu_custom_call.1} parent=1 // pred_check_branch
      %14 = sbr.rel (0) target = $region5
    $region4: #{tpu_custom_call.1} parent=1 // pred_region
      %s15 = sadd.s32 0, 0
      %s16 = smul.u32 2, %s15
      %s18 = ssub.s32 256, 256
      %19 = vsyncadd [#allocation5], %s18
      %s20 = smul.addr %s16, 128
      %s21 = scalar_lea.hbm %s0, %s20
      %s22 = sshll.u32 [#allocation4], 4
      %s23 = int_to_ptr.vmem [resolvable:$true] %s22
      %28 = dma.hbm_to_vmem [thread:$0]  %s21, 256, %s23, [#allocation5], 128, 128, 8
    $region5: #{tpu_custom_call.1} parent=1 // pred_fallthru
      _
    // Predicated region
    $region6: #{tpu_custom_call.1} parent=1 // pred_check
      _
    $region7: #{tpu_custom_call.1} parent=1 // pred_check_branch
      %30 = sbr.rel (0) target = $region9
    $region8: #{tpu_custom_call.1} parent=1 // pred_region
      %s31 = sadd.s32 0, 0
      %s32 = smul.u32 2, %s31
      %s34 = ssub.s32 256, 256
      %35 = vsyncadd [#allocation8], %s34
      %s36 = smul.addr %s32, 128
      %s37 = scalar_lea.hbm %s1, %s36
      %s38 = sshll.u32 [#allocation7], 4
      %s39 = int_to_ptr.vmem [resolvable:$true] %s38
      %44 = dma.hbm_to_vmem [thread:$0]  %s37, 256, %s39, [#allocation8], 128, 128, 8
    $region9: #{tpu_custom_call.1} parent=1 // pred_fallthru
      _
    // Predicated region
    $region10: #{tpu_custom_call.1} parent=1 // pred_check
      _
    $region11: #{tpu_custom_call.1} parent=1 // pred_check_branch
      %46 = sbr.rel (0) target = $region13
    $region12: #{tpu_custom_call.1} parent=1 // pred_region
      %47 = dma.done [#allocation5], 256
    $region13: #{tpu_custom_call.1} parent=1 // pred_fallthru
      _
    // Predicated region
    $region14: #{tpu_custom_call.1} parent=1 // pred_check
      _
    $region15: #{tpu_custom_call.1} parent=1 // pred_check_branch
      %49 = sbr.rel (0) target = $region17
    $region16: #{tpu_custom_call.1} parent=1 // pred_region
      %50 = dma.done [#allocation8], 256
    $region17: #{tpu_custom_call.1} parent=1 // pred_fallthru
      _
    %s51 = sadd.s32 0, 0
    %s52 = smul.u32 2, %s51
    %s53 = sadd.s32 0, 0
    %s54 = smul.u32 2, %s53
    %p55 = scmp.eq.s32.totalorder 0, 0
    // Predicated region
    $region18: #{tpu_custom_call.1} parent=1 // pred_check
      %p56 = pneg %p55
    $region19: #{tpu_custom_call.1} parent=1 // pred_check_branch
      %58 = sbr.rel (%p56) target = $region21
    $region20: #{tpu_custom_call.1} parent=1 // pred_region
      %59 = vst [vmem:[#allocation2] sm:$0xff] 0.0
      %60 = vst [vmem:[#allocation3] sm:$0xff] 0.0
    $region21: #{tpu_custom_call.1} parent=1 // pred_fallthru
      _
    %v61 = vld [vmem:[#allocation4] sm:$0xff]
    %v62 = vld [vmem:[#allocation4 + $0x8] sm:$0xff]
    %v63 = vld [vmem:[#allocation7] sm:$0xff]
    %v64 = vld [vmem:[#allocation7 + $0x8] sm:$0xff]
    %v65 = vsub.f32 %v61, %v63
    %v66 = vsub.f32 %v62, %v64
    %v67 = vld [vmem:[#allocation2] sm:$0xff]
    %v68 = vmul.f32 %v65, %v65
    %v69 = vmul.f32 %v66, %v66
    %v70 = vadd.f32 %v68, %v69
    %v71 = vadd.f32 %v67, %v70
    %72 = vst [vmem:[#allocation2] sm:$0xff] %v71
    %v73 = vld [vmem:[#allocation3] sm:$0xff]
    %v74 = vand.u32 2147483647, %v65
    %v75 = vand.u32 2147483647, %v66
    %v76 = vadd.f32 %v74, %v75
    %v77 = vadd.f32 %v73, %v76
    %78 = vst [vmem:[#allocation3] sm:$0xff] %v77
    // Predicated region
    $region22: #{tpu_custom_call.1} parent=1 // pred_check
      %p79 = pneg %p55
    $region23: #{tpu_custom_call.1} parent=1 // pred_check_branch
      %81 = sbr.rel (%p79) target = $region25
    $region24: #{tpu_custom_call.1} parent=1 // pred_region
      %v82 = vld [vmem:[#allocation2] sm:$0xff]
      %83 = vst [vmem:[#allocation9] sm:$0xff] %v82
      %v84 = vld [vmem:[#allocation3] sm:$0xff]
      %85 = vst [vmem:[#allocation10] sm:$0xff] %v84
    $region25: #{tpu_custom_call.1} parent=1 // pred_fallthru
      _
    // Predicated region
    $region26: #{tpu_custom_call.1} parent=1 // pred_check
      _
    $region27: #{tpu_custom_call.1} parent=1 // pred_check_branch
      %87 = sbr.rel (0) target = $region29
    $region28: #{tpu_custom_call.1} parent=1 // pred_region
      %s89 = ssub.s32 128, 128
      %90 = vsyncadd [#allocation6], %s89
      %s92 = sshll.u32 [#allocation9], 4
      %s93 = int_to_ptr.vmem [resolvable:$true] %s92
      %95 = dma.vmem_to_hbm [thread:$0]  %s93, 128, %s2, [#allocation6]
    $region29: #{tpu_custom_call.1} parent=1 // pred_fallthru
      _
    // Predicated region
    $region30: #{tpu_custom_call.1} parent=1 // pred_check
      _
    $region31: #{tpu_custom_call.1} parent=1 // pred_check_branch
      %97 = sbr.rel (0) target = $region33
    $region32: #{tpu_custom_call.1} parent=1 // pred_region
      %s99 = ssub.s32 128, 128
      %100 = vsyncadd [#allocation11], %s99
      %s102 = sshll.u32 [#allocation10], 4
      %s103 = int_to_ptr.vmem [resolvable:$true] %s102
      %105 = dma.vmem_to_hbm [thread:$0]  %s103, 128, %s3, [#allocation11]
    $region33: #{tpu_custom_call.1} parent=1 // pred_fallthru
      _
    // Predicated region
    $region34: #{tpu_custom_call.1} parent=1 // pred_check
      _
    $region35: #{tpu_custom_call.1} parent=1 // pred_check_branch
      %107 = sbr.rel (0) target = $region37
    $region36: #{tpu_custom_call.1} parent=1 // pred_region
      %108 = dma.done [#allocation6], 128
    $region37: #{tpu_custom_call.1} parent=1 // pred_fallthru
      _
    // Predicated region
    $region38: #{tpu_custom_call.1} parent=1 // pred_check
      _
    $region39: #{tpu_custom_call.1} parent=1 // pred_check_branch
      %110 = sbr.rel (0) target = $region41
    $region40: #{tpu_custom_call.1} parent=1 // pred_region
      %111 = dma.done [#allocation11], 128
    $region41: #{tpu_custom_call.1} parent=1 // pred_fallthru
      _
    %112 = vsyncpa [#allocation5], 1
    %113 = vsyncpa [#allocation8], 1
    %114 = vsyncpa [#allocation6], 1
    %115 = vsyncpa [#allocation11], 1

</llo_original>
